<compile_context>
chip_gen: v6e
topology: v6e:2x2x1
jax: 0.10.0
libtpu: 0.0.40
codegen_flags: <defaults>
</compile_context>

<pallas_src>
import jax
import jax.numpy as jnp
from jax.experimental import pallas as pl
from jax.experimental.pallas import tpu as pltpu
import numpy as np

_LANE = 128          # TPU lane width (last-dim vreg extent)
_B_TILE_MAX = 512    # batch-tile width for large B (amortizes per-step overhead)


# ----------------------------- Pallas kernel -----------------------------

def mps_kernel(c_ref, s_ref, o_ref):
    # c_ref: (1, 1)        SMEM  batch-independent bond-chain scalar
    # s_ref: (Np, B_TILE)  VMEM  per-site / per-batch sums over the physical
    #                            index (Np = 2^k; padded rows are ones)
    # o_ref: (1, B_TILE)   VMEM  lane-dense output tile (batch on lanes)
    s = s_ref[...]
    n = s.shape[0]
    # log2(Np)-depth pairwise product tree over the site (sublane) axis:
    # pure VPU elementwise multiplies, no XLU reduce, no MXU.
    while n > 1:
        half = n // 2
        s = s[:half] * s[half:]          # (half, B_TILE)
        n = half
    o_ref[...] = s * c_ref[0, 0]         # scalar multiply fused into the store


# ------------------------------- wrapper ----------------------------------

def mps_forward(x_bnp, site_tensors):
    """x_bnp: (B, N, P) float32; site_tensors: list of (l, P, r) arrays
    (l_0 = r_{N-1} = 1).  Returns logits of shape (B, 1), matching the module.
    """
    B, N, P = x_bnp.shape

    # ---- batch-independent bond chain, hoisted out of the kernel ----------
    # v <- ones(1, l0); v <- v @ (sum_p A_i).  Tiny (<= D x D) products; XLA
    # evaluates this once per parameter set, never per batch tile.
    v = jnp.ones((1, site_tensors[0].shape[0]), jnp.float32)
    for t in site_tensors:
        v = v @ jnp.sum(t.astype(jnp.float32), axis=1)        # (1, r_i)
    chain_scalar = v.reshape(1, 1)                             # r_{N-1} == 1

    # ---- per-site sums of x: sites on sublanes, batch on lanes ------------
    s = jnp.transpose(jnp.sum(x_bnp.astype(jnp.float32), axis=-1))   # (N, B)

    # Pad sites to a power of two with ones (neutral for the product tree).
    n_pad = pl.next_power_of_2(N)
    if n_pad != N:
        s = jnp.concatenate(
            [s, jnp.ones((n_pad - N, s.shape[1]), jnp.float32)], axis=0)

    # Lane-dense batch padding / tiling: batch on lanes, multiples of 128.
    if B > _B_TILE_MAX:
        b_tile = _B_TILE_MAX
    else:
        b_tile = max(_LANE, ((B + _LANE - 1) // _LANE) * _LANE)
    b_pad = ((B + b_tile - 1) // b_tile) * b_tile
    if b_pad != B:
        s = jnp.pad(s, ((0, 0), (0, b_pad - B)))               # zero-pad lanes
    num_tiles = b_pad // b_tile

    out_1b = pl.pallas_call(
        mps_kernel,
        out_shape=jax.ShapeDtypeStruct((1, b_pad), jnp.float32),
        grid=(num_tiles,),
        in_specs=[
            # (1, 1) f32 scalar, resident in SMEM for the whole grid.
            pl.BlockSpec(memory_space=pltpu.MemorySpace.SMEM),
            # One lane-dense batch tile of the site sums per grid step.
            pl.BlockSpec((n_pad, b_tile), lambda b: (0, b)),
        ],
        out_specs=pl.BlockSpec((1, b_tile), lambda b: (0, b)),
        compiler_params=pltpu.CompilerParams(
            # Batch tiles are independent: lets Mosaic shard them across
            # v7x's two TensorCores; harmless (single TC) on v5e/v6e.
            dimension_semantics=("parallel",),
        ),
    )(chain_scalar, s)

    # Lane-dense (1, b_pad) inside the kernel; module contract is (B, 1).
    # Single cheap relayout, done once outside the hot path.
    return out_1b[0, :B][:, None]


# --------------------------- pure-JAX reference ---------------------------

def mps_reference(x_bnp, site_tensors):
    B = x_bnp.shape[0]
    left = jnp.ones((B, site_tensors[0].shape[0]), jnp.float32)
    for i, A_i in enumerate(site_tensors):
        x_i = x_bnp[:, i, :]
        bpr = jnp.einsum('bl,lpr->bpr', left, A_i)
        left = jnp.einsum('bpr,bq->br', bpr, x_i)   # p and q summed separately
    return left


# ---------------------------------- main ----------------------------------

if __name__ == "__main__":
    num_sites, phys_dim, bond_dim = 8, 4, 8
    batch = 2

    key = jax.random.PRNGKey(0)

    # Deterministic xavier-uniform-style init (torch fan_in = p*r, fan_out = l*r).
    site_tensors = []
    for i in range(num_sites):
        if i == 0:
            shape = (1, phys_dim, bond_dim)
        elif i == num_sites - 1:
            shape = (bond_dim, phys_dim, 1)
        else:
            shape = (bond_dim, phys_dim, bond_dim)
        l, p, r = shape
        fan_in, fan_out = p * r, l * r
        bound = float(np.sqrt(6.0 / (fan_in + fan_out)))
        key, sub = jax.random.split(key)
        site_tensors.append(
            jax.random.uniform(sub, shape, jnp.float32, minval=-bound, maxval=bound))

    key, sub = jax.random.split(key)
    x = jax.random.uniform(sub, (batch, num_sites, phys_dim), jnp.float32)

    out = mps_forward(x, site_tensors)
    out = jax.block_until_ready(out)

    ref = mps_reference(x, site_tensors)
    assert out.shape == (batch, 1)
    np.testing.assert_allclose(np.asarray(out), np.asarray(ref),
                               rtol=5e-5, atol=1e-5)

    print("KERNEL_OK")
</pallas_src>

<mosaic_0001>
module attributes {stable_mosaic.version = 11 : i64} {
  func.func @mps_kernel(%arg0: i32, %arg1: memref<1x1xf32, #tpu.memory_space<smem>>, %arg2: memref<8x128xf32, #tpu.memory_space<vmem>>, %arg3: memref<1x128xf32, #tpu.memory_space<vmem>>) attributes {dimension_semantics = [#tpu.dimension_semantics<parallel>], iteration_bounds = array<i64: 1>, scalar_prefetch = 0 : i64, scratch_operands = 0 : i64, tpu.core_type = #tpu.core_type<tc>, window_params = [{transform_indices = @transform_0, window_bounds = array<i64: 1, 1>}, {transform_indices = @transform_1, window_bounds = array<i64: 8, 128>}, {transform_indices = @transform_2, window_bounds = array<i64: 1, 128>}]} {
    %c0 = arith.constant 0 : index
    %c0_0 = arith.constant 0 : index
    %0 = vector.load %arg2[%c0, %c0_0] : memref<8x128xf32, #tpu.memory_space<vmem>>, vector<8x128xf32>
    %1 = vector.extract_strided_slice %0 {offsets = [0, 0], sizes = [4, 128], strides = [1, 1]} : vector<8x128xf32> to vector<4x128xf32>
    %2 = vector.extract_strided_slice %0 {offsets = [4, 0], sizes = [4, 128], strides = [1, 1]} : vector<8x128xf32> to vector<4x128xf32>
    %3 = arith.mulf %1, %2 : vector<4x128xf32>
    %4 = vector.extract_strided_slice %3 {offsets = [0, 0], sizes = [2, 128], strides = [1, 1]} : vector<4x128xf32> to vector<2x128xf32>
    %5 = vector.extract_strided_slice %3 {offsets = [2, 0], sizes = [2, 128], strides = [1, 1]} : vector<4x128xf32> to vector<2x128xf32>
    %6 = arith.mulf %4, %5 : vector<2x128xf32>
    %7 = vector.extract_strided_slice %6 {offsets = [0, 0], sizes = [1, 128], strides = [1, 1]} : vector<2x128xf32> to vector<1x128xf32>
    %8 = vector.extract_strided_slice %6 {offsets = [1, 0], sizes = [1, 128], strides = [1, 1]} : vector<2x128xf32> to vector<1x128xf32>
    %9 = arith.mulf %7, %8 : vector<1x128xf32>
    %c0_1 = arith.constant 0 : index
    %c0_2 = arith.constant 0 : index
    %10 = memref.load %arg1[%c0_1, %c0_2] : memref<1x1xf32, #tpu.memory_space<smem>>
    %11 = vector.broadcast %10 : f32 to vector<1x128xf32>
    %12 = arith.mulf %9, %11 : vector<1x128xf32>
    %c0_3 = arith.constant 0 : index
    %c0_4 = arith.constant 0 : index
    %13 = vector.load %arg3[%c0_3, %c0_4] : memref<1x128xf32, #tpu.memory_space<vmem>>, vector<1x128xf32>
    tpu.vector_store %arg3[%c0_3, %c0_4], %12 {strides = array<i32>} : memref<1x128xf32, #tpu.memory_space<vmem>>, vector<1x128xf32>,
    return
  }
  func.func @transform_0(%arg0: i32) -> (i32, i32) {
    %c0_i32 = arith.constant 0 : i32
    %c0_i32_0 = arith.constant 0 : i32
    %c0_i32_1 = arith.constant 0 : i32
    return %c0_i32, %c0_i32_0 : i32, i32
  }
  func.func @transform_1(%arg0: i32) -> (i32, i32) {
    %c0_i32 = arith.constant 0 : i32
    %c0_i32_0 = arith.constant 0 : i32
    return %c0_i32, %arg0 : i32, i32
  }
  func.func @transform_2(%arg0: i32) -> (i32, i32) {
    %c0_i32 = arith.constant 0 : i32
    %c0_i32_0 = arith.constant 0 : i32
    return %c0_i32, %arg0 : i32, i32
  }
}

</mosaic_0001>

<llo_original>
// kernel: tpu_custom_call.1
$region0: #{tpu_custom_call.1}
  #allocation0 [shape = 'u32[]', space=smem, size = 0x4, offset = 0x4, fixed_abs, tag = 'smem constant byte address 0x4 - core index']
  #allocation1 [shape = 'u32[144,128]{1,0:T(1,128)}', space=vmem, size = 0x12000, scoped, tag = 'internal scratch']
  #allocation2 [shape = 'f32[1,1]{1,0:T(1,128)S(6)}', space=smem, size = 0x200, scoped, tag = 'scoped memory for tpu_custom_call.1']
  %s0 = inlined_call_operand.<no memory space> [shape: f32[1,1], index: 0, kind: input, shape index: {}]
  %s1 = inlined_call_operand.hbm [shape: f32[8,128], index: 1, kind: input, shape index: {}]
  %s2 = inlined_call_operand.hbm [shape: f32[1,128], index: 2, kind: output, shape index: {}]
  %s3 = sld [smem:[#allocation0]]
  $region22: #{tpu_custom_call.1} parent=0
    _
  %s5 = ssub.s32 1, %s3
  %s6 = scalar_select 0, %s5, %s3
  %7 = sst [smem:[#allocation2]] %s0
  $region1: #{tpu_custom_call.1} parent=0
    #allocation3 [shape = 'u8[4096]{0}', space=vmem, size = 0x1000, scoped, tag = 'input window, operand 1, single buffered']
    #allocation4 [shape = 's32[1]{0}', space=sflag, size = 0x4, scoped, tag = 'scoped memory for tpu_custom_call.1']
    #allocation5 [shape = 's32[1]{0}', space=sflag, size = 0x4, scoped, tag = 'scoped memory for tpu_custom_call.1']
    #allocation6 [shape = 'u8[512]{0}', space=vmem, size = 0x400, scoped, tag = 'output window, operand 0, single buffered']
    %8 = vsyncpa [#allocation4], 0
    %9 = vsyncpa [#allocation5], 0
    // Predicated region
    $region2: #{tpu_custom_call.1} parent=1 // pred_check
      _
    $region3: #{tpu_custom_call.1} parent=1 // pred_check_branch
      %11 = sbr.rel (0) target = $region5
    $region4: #{tpu_custom_call.1} parent=1 // pred_region
      _
    $region5: #{tpu_custom_call.1} parent=1 // pred_fallthru
      _
    // Predicated region
    $region6: #{tpu_custom_call.1} parent=1 // pred_check
      _
    $region7: #{tpu_custom_call.1} parent=1 // pred_check_branch
      %13 = sbr.rel (0) target = $region9
    $region8: #{tpu_custom_call.1} parent=1 // pred_region
      %s15 = ssub.s32 128, 128
      %16 = vsyncadd [#allocation4], %s15
      %s18 = sshll.u32 [#allocation3], 4
      %s19 = int_to_ptr.vmem [resolvable:$true] %s18
      %21 = dma.hbm_to_vmem [thread:$0]  %s1, 128, %s19, [#allocation4]
    $region9: #{tpu_custom_call.1} parent=1 // pred_fallthru
      _
    // Predicated region
    $region10: #{tpu_custom_call.1} parent=1 // pred_check
      _
    $region11: #{tpu_custom_call.1} parent=1 // pred_check_branch
      %23 = sbr.rel (0) target = $region13
    $region12: #{tpu_custom_call.1} parent=1 // pred_region
      %24 = dma.done [#allocation4], 128
    $region13: #{tpu_custom_call.1} parent=1 // pred_fallthru
      _
    %v25 = vld [vmem:[#allocation3] sm:$0xff]
    %v27 = vrot.slane %v25, 4
    %v29 = vmul.f32 %v25, %v27
    %v31 = vrot.slane %v29, 2
    %v33 = vmul.f32 %v29, %v31
    %v35 = vrot.slane %v33, 1
    %v37 = vmul.f32 %v33, %v35
    %s38 = sld [smem:[#allocation2]]
    %v39 = vstv %s38
    %v40 = vmul.f32 %v37, %v39
    %41 = vst [vmem:[#allocation6] sm:$0x1] %v40
    // Predicated region
    $region14: #{tpu_custom_call.1} parent=1 // pred_check
      _
    $region15: #{tpu_custom_call.1} parent=1 // pred_check_branch
      %43 = sbr.rel (0) target = $region17
    $region16: #{tpu_custom_call.1} parent=1 // pred_region
      %s45 = ssub.s32 16, 16
      %46 = vsyncadd [#allocation5], %s45
      %s48 = sshll.u32 [#allocation6], 4
      %s49 = int_to_ptr.vmem [resolvable:$true] %s48
      %51 = dma.vmem_to_hbm [thread:$0]  %s49, 16, %s2, [#allocation5]
    $region17: #{tpu_custom_call.1} parent=1 // pred_fallthru
      _
    // Predicated region
    $region18: #{tpu_custom_call.1} parent=1 // pred_check
      _
    $region19: #{tpu_custom_call.1} parent=1 // pred_check_branch
      %53 = sbr.rel (0) target = $region21
    $region20: #{tpu_custom_call.1} parent=1 // pred_region
      %54 = dma.done [#allocation5], 16
    $region21: #{tpu_custom_call.1} parent=1 // pred_fallthru
      _
    %55 = vsyncpa [#allocation4], 1
    %56 = vsyncpa [#allocation5], 1

</llo_original>
